<compile_context>
chip_gen: v7x
topology: tpu7x:2x2x1
jax: 0.10.0
libtpu: 0.0.40
codegen_flags: <defaults>
</compile_context>

<pallas_src>
import jax
import jax.numpy as jnp
from jax.experimental import pallas as pl
from jax.experimental.pallas import tpu as pltpu


_MAX_VAL = 0.02                      # mmcv.quantize_flow max_val
_QSCALE = 255.0 / (2.0 * _MAX_VAL)   # 255 quantization levels over [-max, max]


def _make_kernel(inv_w, inv_h):
    """Build the fused kernel, closing over the static 1/W, 1/H scales."""

    def kernel(x1_ref, x2_ref, wf_ref, wb_ref, out_ref):
        """flow -> quantize -> normalize -> backbone stem (pixels on lanes).

        x1_ref, x2_ref : (C, tile)   frame t / frame t+1 pixels (channel-major)
        wf_ref         : (2C+1, 2)   flow conv weights + bias
        wb_ref         : (F, 3)      backbone conv weights + bias with the
                                     (q - 127.5)/127.5 normalization folded in
        out_ref        : (F, tile)
        """
        C = x1_ref.shape[0]
        x1 = x1_ref[...].astype(jnp.float32)   # cast in-kernel: no host pass
        x2 = x2_ref[...].astype(jnp.float32)
        wf = wf_ref[...]
        wb = wb_ref[...]

        # ---- flow estimator stand-in: pointwise conv (2C -> 2), VPU/XLU ----
        def flow_comp(col, scale):
            raw = (jnp.sum(wf[0:C, col:col + 1] * x1, axis=0, keepdims=True)
                   + jnp.sum(wf[C:2 * C, col:col + 1] * x2, axis=0,
                             keepdims=True)
                   + wf[2 * C:2 * C + 1, col:col + 1])          # (1, tile)
            return raw * scale                                  # mmcv order

        d_u = flow_comp(0, inv_w)                               # dx / W
        d_v = flow_comp(1, inv_h)                               # dy / H

        # ---- mmcv.quantize_flow: clip +-0.02, shift, floor, cap at 254 -----
        def quantize(d):
            d = jnp.clip(d, -_MAX_VAL, _MAX_VAL) + _MAX_VAL
            return jnp.minimum(jnp.floor(d * _QSCALE), 254.0)

        q_u = quantize(d_u)
        q_v = quantize(d_v)

        # ---- backbone stand-in: pointwise conv (2 -> F) + ReLU -------------
        # (q - 127.5)/127.5 is folded into wb on the host, so this is 2 FMAs.
        feat = wb[:, 0:1] * q_u + wb[:, 1:2] * q_v + wb[:, 2:3]  # (F, tile)
        out_ref[...] = jnp.maximum(feat, 0.0).astype(out_ref.dtype)

    return kernel


def _pick_tile_hw(hw, col_bytes, soft_budget, hard_budget):
    """Pixel-tile width.

    Whole frame if it fits the soft VMEM budget; otherwise the largest
    multiple-of-128 divisor of `hw` under it.  If the divisor structure is
    degenerate (e.g. hw = 128 * prime, which would silently fall off a 3x
    per-step-overhead cliff), fall back to the whole frame as long as it fits
    the hard budget.
    """
    soft_cols = max(128, (soft_budget // col_bytes) // 128 * 128)
    if hw <= soft_cols:
        return hw
    best = 128
    for cand in range(soft_cols, 127, -128):
        if hw % cand == 0:
            best = cand
            break
    if best < 8192 and hw * col_bytes <= hard_budget:
        return hw
    return best


def flow_wrapper_forward(imgs, w_flow, b_flow, w_bb, b_bb, *,
                         out_dtype=jnp.float32):
    """imgs: (B, C, T, H, W) -> backbone features (B, F, T-1, H, W)."""
    B, C, T, H, W = imgs.shape
    F = w_bb.shape[1]
    HW = H * W

    in_bytes = jnp.dtype(imgs.dtype).itemsize
    out_bytes = jnp.dtype(out_dtype).itemsize
    c_sub = -(-C // 8) * 8              # sublane-padded channel rows per block
    f_sub = -(-F // 8) * 8
    # Double-buffered per-pixel-column VMEM: 2 input specs + 1 output, x2 bufs.
    col_bytes = 2 * (2 * c_sub * in_bytes + f_sub * out_bytes)

    # Per-generation VMEM budget (v7x has only 64 MiB physical).
    try:
        vmem_cap = int(pltpu.get_tpu_info().vmem_capacity_bytes)
    except Exception:
        vmem_cap = 64 << 20
    soft_budget = min(vmem_cap // 2, 32 << 20)
    hard_budget = min(3 * vmem_cap // 4, 48 << 20)

    # Frame-aligned flattened pixel axis.  When H*W is already a multiple of
    # 128 (the common case) this is a free reshape of the native-dtype input:
    # no astype pass, no pad pass, no post-kernel crop.
    if HW % 128 == 0:
        HWx = HW
        x = imgs.reshape(B, C, T * HW)
    else:
        # TODO(synk): fallback pads/crops in HBM; a masked-tail kernel would
        # avoid these two extra passes for non-128-multiple pixel planes.
        HWx = -(-HW // 128) * 128
        x = jnp.pad(imgs.reshape(B, C, T, HW),
                    ((0, 0), (0, 0), (0, 0), (0, HWx - HW)))
        x = x.reshape(B, C, T * HWx)

    tile_hw = _pick_tile_hw(HWx, col_bytes, soft_budget, hard_budget)
    n_hw = HWx // tile_hw
    grid = (B, T - 1, n_hw)

    # ---- tiny pointwise weights, packed on the host --------------------------
    wf_packed = jnp.concatenate(
        [w_flow.astype(jnp.float32),
         b_flow.reshape(1, 2).astype(jnp.float32)], axis=0)          # (2C+1, 2)
    # (q - 127.5)/127.5 folded into the backbone conv (linear post-floor, safe).
    wb_packed = jnp.concatenate(
        [(w_bb.astype(jnp.float32) / 127.5).T,
         (b_bb.reshape(-1).astype(jnp.float32)
          - jnp.sum(w_bb.astype(jnp.float32), axis=0))[:, None]],
        axis=1)                                                       # (F, 3)

    vmem_limit = int(min(max(tile_hw * col_bytes + (8 << 20), 32 << 20),
                         100 << 20))

    cost = pl.CostEstimate(
        flops=int(B * (T - 1) * HW * (8 * C + 4 * F + 16)),
        transcendentals=0,
        bytes_accessed=int(B * (T - 1) * HWx
                           * (2 * C * in_bytes + F * out_bytes)),
    )

    kernel = _make_kernel(1.0 / W, 1.0 / H)

    out = pl.pallas_call(
        kernel,
        out_shape=jax.ShapeDtypeStruct((B, F, (T - 1) * HWx), out_dtype),
        grid_spec=pltpu.PrefetchScalarGridSpec(
            num_scalar_prefetch=0,
            grid=grid,
            in_specs=[
                # frame t channels for this pixel tile
                pl.BlockSpec((None, C, tile_hw),
                             lambda b, t, p: (b, 0, t * n_hw + p)),
                # frame t+1 channels for this pixel tile
                pl.BlockSpec((None, C, tile_hw),
                             lambda b, t, p: (b, 0, (t + 1) * n_hw + p)),
                pl.BlockSpec((2 * C + 1, 2), lambda b, t, p: (0, 0)),
                pl.BlockSpec((F, 3), lambda b, t, p: (0, 0)),
            ],
            out_specs=pl.BlockSpec((None, F, tile_hw),
                                   lambda b, t, p: (b, 0, t * n_hw + p)),
        ),
        compiler_params=pltpu.CompilerParams(
            dimension_semantics=("parallel", "parallel", "parallel"),
            vmem_limit_bytes=vmem_limit),
        cost_estimate=cost,
    )(x, x, wf_packed, wb_packed)

    feat = out.reshape(B, F, T - 1, HWx)
    if HWx != HW:
        feat = feat[..., :HW]
    return feat.reshape(B, F, T - 1, H, W)


def _reference_forward(imgs, w_flow, b_flow, w_bb, b_bb):
    """Pure-JAX translation of the PyTorch Flow_Wrapper forward (unfused)."""
    B, C, T, H, W = imgs.shape
    F = w_bb.shape[1]
    img1 = imgs[:, :, :-1, :, :]
    img2 = imgs[:, :, 1:, :, :]
    pair = jnp.concatenate([img1, img2], axis=1)               # (B, 2C, T-1, H, W)
    pair = jnp.transpose(pair, (0, 2, 1, 3, 4)).reshape(B * (T - 1), 2 * C, H, W)
    x = jnp.transpose(pair, (0, 2, 3, 1)).reshape(-1, 2 * C)   # (P, 2C)
    flow = jnp.dot(x.astype(jnp.float32), w_flow,
                   precision=jax.lax.Precision.HIGHEST) + b_flow
    d = flow * jnp.array([[1.0 / W, 1.0 / H]], dtype=jnp.float32)
    d = jnp.clip(d, -_MAX_VAL, _MAX_VAL) + _MAX_VAL
    q = jnp.minimum(jnp.floor(255.0 * d / (2.0 * _MAX_VAL)), 254.0)
    n = (q - 127.5) / 127.5
    feat = jnp.maximum(
        jnp.dot(n, w_bb, precision=jax.lax.Precision.HIGHEST) + b_bb, 0.0)
    feat = feat.reshape(B, T - 1, H, W, F)
    return jnp.transpose(feat, (0, 4, 1, 2, 3))


if __name__ == "__main__":
    # Small shapes consistent with a (B, C, T, H, W) video input.
    B, C, T, H, W = 2, 3, 4, 16, 16
    F = 32   # synthetic backbone feature channels

    key = jax.random.PRNGKey(0)
    k_img, k_wf, k_bf, k_wb, k_bb = jax.random.split(key, 5)

    imgs = jax.random.uniform(k_img, (B, C, T, H, W), dtype=jnp.float32) * 255.0

    # Deterministic synthetic parameters (stand-ins for PWC-Net / backbone).
    w_flow = jax.random.normal(k_wf, (2 * C, 2), dtype=jnp.float32) * 0.01
    b_flow = jax.random.normal(k_bf, (1, 2), dtype=jnp.float32) * 0.01
    w_bb = jax.random.normal(k_wb, (2, F), dtype=jnp.float32) * 0.1
    b_bb = jax.random.normal(k_bb, (1, F), dtype=jnp.float32) * 0.1

    ref = _reference_forward(imgs, w_flow, b_flow, w_bb, b_bb)

    # f32 output path
    feat = jax.jit(flow_wrapper_forward)(imgs, w_flow, b_flow, w_bb, b_bb)
    jax.block_until_ready(feat)
    assert feat.shape == (B, F, T - 1, H, W)
    err = float(jnp.max(jnp.abs(feat - ref)))
    # Tolerance allows a rare one-level quantization-bin flip from f32
    # summation-order differences in the tiny flow dot.
    assert err < 2e-2, f"f32 max abs err {err}"

    # bf16 output path (halves the dominant HBM stream; compute stays f32).
    feat_bf16 = jax.jit(
        lambda *a: flow_wrapper_forward(*a, out_dtype=jnp.bfloat16))(
            imgs, w_flow, b_flow, w_bb, b_bb)
    jax.block_until_ready(feat_bf16)
    assert feat_bf16.dtype == jnp.bfloat16
    err_bf16 = float(jnp.max(jnp.abs(feat_bf16.astype(jnp.float32) - ref)))
    assert err_bf16 < 6e-2, f"bf16 max abs err {err_bf16}"

    print("KERNEL_OK")
</pallas_src>

<mosaic_0001>
module attributes {stable_mosaic.version = 11 : i64} {
  func.func @kernel(%arg0: i32, %arg1: i32, %arg2: i32, %arg3: memref<1x3x256xf32, #tpu.memory_space<vmem>>, %arg4: memref<1x3x256xf32, #tpu.memory_space<vmem>>, %arg5: memref<7x2xf32, #tpu.memory_space<vmem>>, %arg6: memref<32x3xf32, #tpu.memory_space<vmem>>, %arg7: memref<1x32x256xf32, #tpu.memory_space<vmem>>) attributes {dimension_semantics = [#tpu.dimension_semantics<parallel>, #tpu.dimension_semantics<parallel>, #tpu.dimension_semantics<parallel>], iteration_bounds = array<i64: 2, 3, 1>, scalar_prefetch = 0 : i64, scratch_operands = 0 : i64, tpu.core_type = #tpu.core_type<tc>, window_params = [{transform_indices = @transform_0, window_bounds = array<i64: 1, 3, 256>}, {transform_indices = @transform_1, window_bounds = array<i64: 1, 3, 256>}, {pipeline_mode = #tpu.pipeline_mode<synchronous>, transform_indices = @transform_2, window_bounds = array<i64: 7, 2>}, {pipeline_mode = #tpu.pipeline_mode<synchronous>, transform_indices = @transform_3, window_bounds = array<i64: 32, 3>}, {transform_indices = @transform_4, window_bounds = array<i64: 1, 32, 256>}]} {
    %c0 = arith.constant 0 : index
    %c0_0 = arith.constant 0 : index
    %c0_1 = arith.constant 0 : index
    %0 = vector.load %arg3[%c0, %c0_0, %c0_1] : memref<1x3x256xf32, #tpu.memory_space<vmem>>, vector<1x3x256xf32>
    %1 = vector.shape_cast %0 : vector<1x3x256xf32> to vector<3x256xf32>
    %c0_2 = arith.constant 0 : index
    %c0_3 = arith.constant 0 : index
    %c0_4 = arith.constant 0 : index
    %2 = vector.load %arg4[%c0_2, %c0_3, %c0_4] : memref<1x3x256xf32, #tpu.memory_space<vmem>>, vector<1x3x256xf32>
    %3 = vector.shape_cast %2 : vector<1x3x256xf32> to vector<3x256xf32>
    %c0_5 = arith.constant 0 : index
    %c0_6 = arith.constant 0 : index
    %4 = vector.load %arg5[%c0_5, %c0_6] : memref<7x2xf32, #tpu.memory_space<vmem>>, vector<7x2xf32>
    %c0_7 = arith.constant 0 : index
    %c0_8 = arith.constant 0 : index
    %5 = vector.load %arg6[%c0_7, %c0_8] : memref<32x3xf32, #tpu.memory_space<vmem>>, vector<32x3xf32>
    %6 = vector.extract_strided_slice %4 {offsets = [0, 0], sizes = [3, 1], strides = [1, 1]} : vector<7x2xf32> to vector<3x1xf32>
    %7 = vector.broadcast %6 : vector<3x1xf32> to vector<3x256xf32>
    %8 = arith.mulf %7, %1 : vector<3x256xf32>
    %cst = arith.constant dense<0.000000e+00> : vector<256xf32>
    %9 = vector.multi_reduction <add>, %8, %cst [0] : vector<3x256xf32> to vector<256xf32>
    %10 = vector.shape_cast %9 : vector<256xf32> to vector<1x256xf32>
    %11 = vector.extract_strided_slice %4 {offsets = [3, 0], sizes = [3, 1], strides = [1, 1]} : vector<7x2xf32> to vector<3x1xf32>
    %12 = vector.broadcast %11 : vector<3x1xf32> to vector<3x256xf32>
    %13 = arith.mulf %12, %3 : vector<3x256xf32>
    %cst_9 = arith.constant dense<0.000000e+00> : vector<256xf32>
    %14 = vector.multi_reduction <add>, %13, %cst_9 [0] : vector<3x256xf32> to vector<256xf32>
    %15 = vector.shape_cast %14 : vector<256xf32> to vector<1x256xf32>
    %16 = arith.addf %10, %15 : vector<1x256xf32>
    %17 = vector.extract_strided_slice %4 {offsets = [6, 0], sizes = [1, 1], strides = [1, 1]} : vector<7x2xf32> to vector<1x1xf32>
    %18 = vector.broadcast %17 : vector<1x1xf32> to vector<1x256xf32>
    %19 = arith.addf %16, %18 : vector<1x256xf32>
    %cst_10 = arith.constant 6.250000e-02 : f32
    %20 = vector.broadcast %cst_10 : f32 to vector<1x256xf32>
    %21 = arith.mulf %19, %20 : vector<1x256xf32>
    %22 = vector.extract_strided_slice %4 {offsets = [0, 1], sizes = [3, 1], strides = [1, 1]} : vector<7x2xf32> to vector<3x1xf32>
    %23 = vector.broadcast %22 : vector<3x1xf32> to vector<3x256xf32>
    %24 = arith.mulf %23, %1 : vector<3x256xf32>
    %cst_11 = arith.constant dense<0.000000e+00> : vector<256xf32>
    %25 = vector.multi_reduction <add>, %24, %cst_11 [0] : vector<3x256xf32> to vector<256xf32>
    %26 = vector.shape_cast %25 : vector<256xf32> to vector<1x256xf32>
    %27 = vector.extract_strided_slice %4 {offsets = [3, 1], sizes = [3, 1], strides = [1, 1]} : vector<7x2xf32> to vector<3x1xf32>
    %28 = vector.broadcast %27 : vector<3x1xf32> to vector<3x256xf32>
    %29 = arith.mulf %28, %3 : vector<3x256xf32>
    %cst_12 = arith.constant dense<0.000000e+00> : vector<256xf32>
    %30 = vector.multi_reduction <add>, %29, %cst_12 [0] : vector<3x256xf32> to vector<256xf32>
    %31 = vector.shape_cast %30 : vector<256xf32> to vector<1x256xf32>
    %32 = arith.addf %26, %31 : vector<1x256xf32>
    %33 = vector.extract_strided_slice %4 {offsets = [6, 1], sizes = [1, 1], strides = [1, 1]} : vector<7x2xf32> to vector<1x1xf32>
    %34 = vector.broadcast %33 : vector<1x1xf32> to vector<1x256xf32>
    %35 = arith.addf %32, %34 : vector<1x256xf32>
    %cst_13 = arith.constant 6.250000e-02 : f32
    %36 = vector.broadcast %cst_13 : f32 to vector<1x256xf32>
    %37 = arith.mulf %35, %36 : vector<1x256xf32>
    %cst_14 = arith.constant -2.000000e-02 : f32
    %cst_15 = arith.constant 2.000000e-02 : f32
    %38 = vector.broadcast %cst_14 : f32 to vector<1x256xf32>
    %39 = arith.maximumf %38, %21 : vector<1x256xf32>
    %40 = vector.broadcast %cst_15 : f32 to vector<1x256xf32>
    %41 = arith.minimumf %40, %39 : vector<1x256xf32>
    %cst_16 = arith.constant 2.000000e-02 : f32
    %42 = vector.broadcast %cst_16 : f32 to vector<1x256xf32>
    %43 = arith.addf %41, %42 : vector<1x256xf32>
    %cst_17 = arith.constant 6.375000e+03 : f32
    %44 = vector.broadcast %cst_17 : f32 to vector<1x256xf32>
    %45 = arith.mulf %43, %44 : vector<1x256xf32>
    %46 = math.floor %45 : vector<1x256xf32>
    %cst_18 = arith.constant 2.540000e+02 : f32
    %47 = vector.broadcast %cst_18 : f32 to vector<1x256xf32>
    %48 = arith.minimumf %46, %47 : vector<1x256xf32>
    %cst_19 = arith.constant -2.000000e-02 : f32
    %cst_20 = arith.constant 2.000000e-02 : f32
    %49 = vector.broadcast %cst_19 : f32 to vector<1x256xf32>
    %50 = arith.maximumf %49, %37 : vector<1x256xf32>
    %51 = vector.broadcast %cst_20 : f32 to vector<1x256xf32>
    %52 = arith.minimumf %51, %50 : vector<1x256xf32>
    %cst_21 = arith.constant 2.000000e-02 : f32
    %53 = vector.broadcast %cst_21 : f32 to vector<1x256xf32>
    %54 = arith.addf %52, %53 : vector<1x256xf32>
    %cst_22 = arith.constant 6.375000e+03 : f32
    %55 = vector.broadcast %cst_22 : f32 to vector<1x256xf32>
    %56 = arith.mulf %54, %55 : vector<1x256xf32>
    %57 = math.floor %56 : vector<1x256xf32>
    %cst_23 = arith.constant 2.540000e+02 : f32
    %58 = vector.broadcast %cst_23 : f32 to vector<1x256xf32>
    %59 = arith.minimumf %57, %58 : vector<1x256xf32>
    %60 = vector.extract_strided_slice %5 {offsets = [0, 0], sizes = [32, 1], strides = [1, 1]} : vector<32x3xf32> to vector<32x1xf32>
    %61 = vector.broadcast %60 : vector<32x1xf32> to vector<32x256xf32>
    %62 = vector.broadcast %48 : vector<1x256xf32> to vector<32x256xf32>
    %63 = arith.mulf %61, %62 : vector<32x256xf32>
    %64 = vector.extract_strided_slice %5 {offsets = [0, 1], sizes = [32, 1], strides = [1, 1]} : vector<32x3xf32> to vector<32x1xf32>
    %65 = vector.broadcast %64 : vector<32x1xf32> to vector<32x256xf32>
    %66 = vector.broadcast %59 : vector<1x256xf32> to vector<32x256xf32>
    %67 = arith.mulf %65, %66 : vector<32x256xf32>
    %68 = arith.addf %63, %67 : vector<32x256xf32>
    %69 = vector.extract_strided_slice %5 {offsets = [0, 2], sizes = [32, 1], strides = [1, 1]} : vector<32x3xf32> to vector<32x1xf32>
    %70 = vector.broadcast %69 : vector<32x1xf32> to vector<32x256xf32>
    %71 = arith.addf %68, %70 : vector<32x256xf32>
    %cst_24 = arith.constant 0.000000e+00 : f32
    %72 = vector.broadcast %cst_24 : f32 to vector<32x256xf32>
    %73 = arith.maximumf %71, %72 : vector<32x256xf32>
    %c0_25 = arith.constant 0 : index
    %c0_26 = arith.constant 0 : index
    %c0_27 = arith.constant 0 : index
    %74 = vector.load %arg7[%c0_25, %c0_26, %c0_27] : memref<1x32x256xf32, #tpu.memory_space<vmem>>, vector<1x32x256xf32>
    %75 = vector.shape_cast %74 : vector<1x32x256xf32> to vector<32x256xf32>
    %76 = vector.shape_cast %73 : vector<32x256xf32> to vector<1x32x256xf32>
    tpu.vector_store %arg7[%c0_25, %c0_26, %c0_27], %76 {strides = array<i32>} : memref<1x32x256xf32, #tpu.memory_space<vmem>>, vector<1x32x256xf32>,
    return
  }
  func.func @transform_0(%arg0: i32, %arg1: i32, %arg2: i32) -> (i32, i32, i32) {
    %c1_i32 = arith.constant 1 : i32
    %0 = arith.muli %arg1, %c1_i32 : i32
    %1 = arith.addi %0, %arg2 : i32
    %c0_i32 = arith.constant 0 : i32
    %c0_i32_0 = arith.constant 0 : i32
    return %arg0, %c0_i32, %1 : i32, i32, i32
  }
  func.func @transform_1(%arg0: i32, %arg1: i32, %arg2: i32) -> (i32, i32, i32) {
    %c1_i32 = arith.constant 1 : i32
    %0 = arith.addi %arg1, %c1_i32 : i32
    %c1_i32_0 = arith.constant 1 : i32
    %1 = arith.muli %0, %c1_i32_0 : i32
    %2 = arith.addi %1, %arg2 : i32
    %c0_i32 = arith.constant 0 : i32
    %c0_i32_1 = arith.constant 0 : i32
    return %arg0, %c0_i32, %2 : i32, i32, i32
  }
  func.func @transform_2(%arg0: i32, %arg1: i32, %arg2: i32) -> (i32, i32) {
    %c0_i32 = arith.constant 0 : i32
    %c0_i32_0 = arith.constant 0 : i32
    %c0_i32_1 = arith.constant 0 : i32
    return %c0_i32, %c0_i32_0 : i32, i32
  }
  func.func @transform_3(%arg0: i32, %arg1: i32, %arg2: i32) -> (i32, i32) {
    %c0_i32 = arith.constant 0 : i32
    %c0_i32_0 = arith.constant 0 : i32
    %c0_i32_1 = arith.constant 0 : i32
    return %c0_i32, %c0_i32_0 : i32, i32
  }
  func.func @transform_4(%arg0: i32, %arg1: i32, %arg2: i32) -> (i32, i32, i32) {
    %c1_i32 = arith.constant 1 : i32
    %0 = arith.muli %arg1, %c1_i32 : i32
    %1 = arith.addi %0, %arg2 : i32
    %c0_i32 = arith.constant 0 : i32
    %c0_i32_0 = arith.constant 0 : i32
    return %arg0, %c0_i32, %1 : i32, i32, i32
  }
}

</mosaic_0001>

<llo_original>
// kernel: flow_wrapper_forward.1
$region0: #{flow_wrapper_forward.1}
  #allocation0 [shape = 'u32[]', space=smem, size = 0x4, offset = 0x4, fixed_abs, tag = 'smem constant byte address 0x4 - core index']
  #allocation1 [shape = 'u32[144,128]{1,0:T(1,128)}', space=vmem, size = 0x12000, scoped, tag = 'internal scratch']
  %s0 = inlined_call_operand.vmem [shape: f32[2,3,1024], index: 0, kind: input, shape index: {}, may-alias: {0,1}]
  %s1 = inlined_call_operand.vmem [shape: f32[2,3,1024], index: 1, kind: input, shape index: {}, may-alias: {0,1}]
  %s2 = inlined_call_operand.vmem [shape: f32[7,2], index: 2, kind: input, shape index: {}]
  %s3 = inlined_call_operand.vmem [shape: f32[32,3], index: 3, kind: input, shape index: {}]
  %s4 = inlined_call_operand.vmem [shape: f32[2,32,768], index: 4, kind: output, shape index: {}]
  %s5 = sld [smem:[#allocation0]]
  $region68: #{flow_wrapper_forward.1} parent=0
    _
  %s7 = ssub.s32 1, %s5
  %s8 = scalar_select 0, %s7, %s5
  $region1: #{flow_wrapper_forward.1} parent=0
    #allocation2 [shape = 'u8[65536]{0}', space=vmem, size = 0x10000, scoped, tag = 'output window, operand 0']
    loop: start=0, step=1, limit=8
    $region2: #{flow_wrapper_forward.1} parent=1 // loop_pre_header
      _
    $region3: #{flow_wrapper_forward.1} parent=1 // loop_header
      %s10 = sphi 0, %s14
      %p11 = scmp.ge.s32.totalorder %s10, 8
      %s17 = sphi 0, %s36
      %s18 = sphi 0, %s32
      %s19 = sphi 0, %s28
      %s20 = sphi 0, %s17
      %s21 = sphi 0, %s18
      %s22 = sphi 0, %s19
      %s23 = sphi 0, %s20
      %s24 = sphi 0, %s21
      %s25 = sphi 0, %s22
      %s43 = sphi 0, %s45
      %s46 = sphi 0, %s43
      %s47 = sphi 0, %s46
      %s63 = sphi 0, %s47
      %s75 = sphi 0, %s77
      %s78 = sphi 0, %s75
      %s79 = sphi 0, %s78
      %s95 = sphi 0, %s79
      %s99 = sphi 0, %s99
      %s101 = sphi 0, %s99
      %s102 = sphi 0, %s101
      %s116 = sphi 0, %s102
      %s120 = sphi 0, %s120
      %s122 = sphi 0, %s120
      %s123 = sphi 0, %s122
      %s137 = sphi 0, %s123
      %s147 = sphi 0, %s149
      %s150 = sphi 0, %s147
      %s151 = sphi 0, %s150
      %s167 = sphi 0, %s151
    $region4: #{flow_wrapper_forward.1} parent=1 // loop_header_branch
      %13 = sbr.rel (%p11) target = $region8
    $region5: #{flow_wrapper_forward.1} parent=1 // loop_body
      %s15 = ssub.s32 %s10, 1
      %s16 = ssub.s32 %s10, 2
      %s26 = sadd.s32 1, %s19
      %p27 = scmp.ge.s32.totalorder %s26, 1
      %s28 = scalar_select %p27, 0, %s26
      %s29 = sadd.s32 1, %s18
      %s30 = scalar_select %p27, %s29, %s18
      %p31 = scmp.ge.s32.totalorder %s30, 3
      %s32 = scalar_select %p31, 0, %s30
      %s33 = sadd.s32 1, %s17
      %s34 = scalar_select %p31, %s33, %s17
      %p35 = scmp.ge.s32.totalorder %s34, 2
      %s36 = scalar_select %p35, 0, %s34
      %s37 = sadd.s32 %s18, %s19
      %s38 = sadd.s32 %s32, %s28
      %s39 = ssub.s32 %s17, %s36
      %s40 = ssub.s32 %s37, %s38
      %s41 = sor.u32 %s39, %s40
      %p42 = scmp.eq.s32.totalorder %s41, 0
      %s44 = sadd.s32 %s43, 1
      %s45 = scalar_select %p42, %s43, %s44
      %p48 = pneg %p42
      %p49 = scmp.eq.s32.totalorder %s10, 5
      %p50 = por %p48, %p49
      %p51 = scmp.ne.s32.totalorder %s43, %s46
      %p52 = scmp.eq.s32.totalorder %s10, 0
      %p53 = por %p51, %p52
      %p54 = scmp.ne.s32.totalorder %s43, %s46
      %p55 = scmp.eq.s32.totalorder %s15, 5
      %p56 = por %p54, %p55
      %p57 = scmp.ne.s32.totalorder %s46, %s47
      %p58 = scmp.eq.s32.totalorder %s15, 0
      %p59 = por %p57, %p58
      %p60 = scmp.ne.s32.totalorder %s46, %s47
      %p61 = scmp.eq.s32.totalorder %s16, 5
      %p62 = por %p60, %p61
      %p64 = scmp.ne.s32.totalorder %s47, %s63
      %p65 = scmp.eq.s32.totalorder %s16, 0
      %p66 = por %p64, %p65
      %s67 = sadd.s32 %s18, 1
      %s68 = sadd.s32 %s67, %s19
      %s69 = sadd.s32 %s32, 1
      %s70 = sadd.s32 %s69, %s28
      %s71 = ssub.s32 %s17, %s36
      %s72 = ssub.s32 %s68, %s70
      %s73 = sor.u32 %s71, %s72
      %p74 = scmp.eq.s32.totalorder %s73, 0
      %s76 = sadd.s32 %s75, 1
      %s77 = scalar_select %p74, %s75, %s76
      %p80 = pneg %p74
      %p81 = scmp.eq.s32.totalorder %s10, 5
      %p82 = por %p80, %p81
      %p83 = scmp.ne.s32.totalorder %s75, %s78
      %p84 = scmp.eq.s32.totalorder %s10, 0
      %p85 = por %p83, %p84
      %p86 = scmp.ne.s32.totalorder %s75, %s78
      %p87 = scmp.eq.s32.totalorder %s15, 5
      %p88 = por %p86, %p87
      %p89 = scmp.ne.s32.totalorder %s78, %s79
      %p90 = scmp.eq.s32.totalorder %s15, 0
      %p91 = por %p89, %p90
      %p92 = scmp.ne.s32.totalorder %s78, %s79
      %p93 = scmp.eq.s32.totalorder %s16, 5
      %p94 = por %p92, %p93
      %p96 = scmp.ne.s32.totalorder %s79, %s95
      %p97 = scmp.eq.s32.totalorder %s16, 0
      %p98 = por %p96, %p97
      %s100 = sadd.s32 %s99, 1
      %p103 = scmp.eq.s32.totalorder %s10, 5
      %p104 = scmp.ne.s32.totalorder %s99, %s101
      %p105 = scmp.eq.s32.totalorder %s10, 0
      %p106 = por %p104, %p105
      %p107 = scmp.ne.s32.totalorder %s99, %s101
      %p108 = scmp.eq.s32.totalorder %s15, 5
      %p109 = por %p107, %p108
      %p110 = scmp.ne.s32.totalorder %s101, %s102
      %p111 = scmp.eq.s32.totalorder %s15, 0
      %p112 = por %p110, %p111
      %p113 = scmp.ne.s32.totalorder %s101, %s102
      %p114 = scmp.eq.s32.totalorder %s16, 5
      %p115 = por %p113, %p114
      %p117 = scmp.ne.s32.totalorder %s102, %s116
      %p118 = scmp.eq.s32.totalorder %s16, 0
      %p119 = por %p117, %p118
      %s121 = sadd.s32 %s120, 1
      %p124 = scmp.eq.s32.totalorder %s10, 5
      %p125 = scmp.ne.s32.totalorder %s120, %s122
      %p126 = scmp.eq.s32.totalorder %s10, 0
      %p127 = por %p125, %p126
      %p128 = scmp.ne.s32.totalorder %s120, %s122
      %p129 = scmp.eq.s32.totalorder %s15, 5
      %p130 = por %p128, %p129
      %p131 = scmp.ne.s32.totalorder %s122, %s123
      %p132 = scmp.eq.s32.totalorder %s15, 0
      %p133 = por %p131, %p132
      %p134 = scmp.ne.s32.totalorder %s122, %s123
      %p135 = scmp.eq.s32.totalorder %s16, 5
      %p136 = por %p134, %p135
      %p138 = scmp.ne.s32.totalorder %s123, %s137
      %p139 = scmp.eq.s32.totalorder %s16, 0
      %p140 = por %p138, %p139
      %s141 = sadd.s32 %s18, %s19
      %s142 = sadd.s32 %s32, %s28
      %s143 = ssub.s32 %s17, %s36
      %s144 = ssub.s32 %s141, %s142
      %s145 = sor.u32 %s143, %s144
      %p146 = scmp.eq.s32.totalorder %s145, 0
      %s148 = sadd.s32 %s147, 1
      %s149 = scalar_select %p146, %s147, %s148
      %p152 = pneg %p146
      %p153 = scmp.eq.s32.totalorder %s10, 5
      %p154 = por %p152, %p153
      %p155 = scmp.ne.s32.totalorder %s147, %s150
      %p156 = scmp.eq.s32.totalorder %s10, 0
      %p157 = por %p155, %p156
      %p158 = scmp.ne.s32.totalorder %s147, %s150
      %p159 = scmp.eq.s32.totalorder %s15, 5
      %p160 = por %p158, %p159
      %p161 = scmp.ne.s32.totalorder %s150, %s151
      %p162 = scmp.eq.s32.totalorder %s15, 0
      %p163 = por %p161, %p162
      %p164 = scmp.ne.s32.totalorder %s150, %s151
      %p165 = scmp.eq.s32.totalorder %s16, 5
      %p166 = por %p164, %p165
      %p168 = scmp.ne.s32.totalorder %s151, %s167
      %p169 = scmp.eq.s32.totalorder %s16, 0
      %p170 = por %p168, %p169
      %p171 = scmp.le.s32.totalorder 1, %s10
      %p172 = scmp.lt.s32.totalorder %s10, 7
      %p173 = pnand %p171, %p172
      %p174 = pneg %p173
      // Predicated region
      $region9: #{flow_wrapper_forward.1} parent=5 // pred_check
        _
      $region10: #{flow_wrapper_forward.1} parent=5 // pred_check_branch
        %176 = sbr.rel (%p173) target = $region12
      $region11: #{flow_wrapper_forward.1} parent=5 // pred_region
        %s177 = ssub.s32 %s10, 1
        // Predicated region
        $region13: #{flow_wrapper_forward.1} parent=11 // pred_check
          %p178 = pneg %p112
        $region14: #{flow_wrapper_forward.1} parent=11 // pred_check_branch
          %180 = sbr.rel (%p178) target = $region16
        $region15: #{flow_wrapper_forward.1} parent=11 // pred_region
          _
        $region16: #{flow_wrapper_forward.1} parent=11 // pred_fallthru
          _
        // Predicated region
        $region17: #{flow_wrapper_forward.1} parent=11 // pred_check
          %p181 = pneg %p133
        $region18: #{flow_wrapper_forward.1} parent=11 // pred_check_branch
          %183 = sbr.rel (%p181) target = $region20
        $region19: #{flow_wrapper_forward.1} parent=11 // pred_region
          _
        $region20: #{flow_wrapper_forward.1} parent=11 // pred_fallthru
          _
      $region12: #{flow_wrapper_forward.1} parent=5 // pred_fallthru
        _
      %p184 = scmp.lt.s32.totalorder %s10, 6
      // Predicated region
      $region21: #{flow_wrapper_forward.1} parent=5 // pred_check
        %p185 = pneg %p184
      $region22: #{flow_wrapper_forward.1} parent=5 // pred_check_branch
        %187 = sbr.rel (%p185) target = $region24
      $region23: #{flow_wrapper_forward.1} parent=5 // pred_region
        // Predicated region
        $region25: #{flow_wrapper_forward.1} parent=23 // pred_check
          %p188 = pneg %p53
        $region26: #{flow_wrapper_forward.1} parent=23 // pred_check_branch
          %190 = sbr.rel (%p188) target = $region28
        $region27: #{flow_wrapper_forward.1} parent=23 // pred_region
          %s191 = sadd.s32 %s18, %s19
          %s192 = smul.u32 2, %s191
          %p193 = scmp.lt.s32.totalorder %s17, 1
          %s194 = scalar_select %p193, %s17, 1
          %p195 = scmp.lt.s32.totalorder %s192, 7
          %s196 = scalar_select %p195, %s192, 7
          %s197 = smul.addr %s194, 8
          %s198 = sadd.s32 %s196, %s197
          %s199 = smul.addr %s198, 4
          %s200 = scalar_lea.vmem %s0, %s199
          %s201 = sadd.s32 %s18, %s19
          %s202 = smul.u32 2, %s201
        $region28: #{flow_wrapper_forward.1} parent=23 // pred_fallthru
          _
        // Predicated region
        $region29: #{flow_wrapper_forward.1} parent=23 // pred_check
          %p203 = pneg %p85
        $region30: #{flow_wrapper_forward.1} parent=23 // pred_check_branch
          %205 = sbr.rel (%p203) target = $region32
        $region31: #{flow_wrapper_forward.1} parent=23 // pred_region
          %s206 = sadd.s32 %s18, 1
          %s207 = sadd.s32 %s206, %s19
          %s208 = smul.u32 2, %s207
          %p209 = scmp.lt.s32.totalorder %s17, 1
          %s210 = scalar_select %p209, %s17, 1
          %p211 = scmp.lt.s32.totalorder %s208, 7
          %s212 = scalar_select %p211, %s208, 7
          %s213 = smul.addr %s210, 8
          %s214 = sadd.s32 %s212, %s213
          %s215 = smul.addr %s214, 4
          %s216 = scalar_lea.vmem %s1, %s215
          %s217 = sadd.s32 %s18, 1
          %s218 = sadd.s32 %s217, %s19
          %s219 = smul.u32 2, %s218
        $region32: #{flow_wrapper_forward.1} parent=23 // pred_fallthru
          _
      $region24: #{flow_wrapper_forward.1} parent=5 // pred_fallthru
        _
      %p220 = scmp.le.s32.totalorder 1, %s10
      %p221 = scmp.lt.s32.totalorder %s10, 7
      %p222 = pnand %p220, %p221
      %p223 = pneg %p222
      // Predicated region
      $region33: #{flow_wrapper_forward.1} parent=5 // pred_check
        _
      $region34: #{flow_wrapper_forward.1} parent=5 // pred_check_branch
        %225 = sbr.rel (%p222) target = $region36
      $region35: #{flow_wrapper_forward.1} parent=5 // pred_region
        %s226 = ssub.s32 %s10, 1
        %s227 = sadd.s32 %s21, %s22
        %s228 = smul.u32 2, %s227
        %p229 = scmp.lt.s32.totalorder %s20, 1
        %s230 = scalar_select %p229, %s20, 1
        %p231 = scmp.lt.s32.totalorder %s228, 7
        %s232 = scalar_select %p231, %s228, 7
        %s233 = smul.addr %s230, 8
        %s234 = sadd.s32 %s232, %s233
        %s235 = smul.addr %s234, 4
        %s236 = scalar_lea.vmem %s0, %s235
        %p237 = pneg %p59
        %p238 = pneg %p56
        %s239 = sadd.s32 %s21, 1
        %s240 = sadd.s32 %s239, %s22
        %s241 = smul.u32 2, %s240
        %p242 = scmp.lt.s32.totalorder %s20, 1
        %s243 = scalar_select %p242, %s20, 1
        %p244 = scmp.lt.s32.totalorder %s241, 7
        %s245 = scalar_select %p244, %s241, 7
        %s246 = smul.addr %s243, 8
        %s247 = sadd.s32 %s245, %s246
        %s248 = smul.addr %s247, 4
        %s249 = scalar_lea.vmem %s1, %s248
        %p250 = pneg %p91
        %p251 = pneg %p88
        %p252 = pneg %p112
        %p253 = pneg %p109
        %p254 = pneg %p133
        %p255 = pneg %p130
        %p256 = pneg %p163
        %p257 = pneg %p160
        %s258 = sand.u32 %s150, 1
        %s259 = sand.u32 %s150, 1
        %s260 = smul.addr %s259, 64
        %s261 = scalar_lea.vmem [#allocation2], %s260
        %s262 = sadd.s32 %s21, %s22
        %s263 = smul.u32 2, %s262
        %p264 = scmp.lt.s32.totalorder %s20, 1
        %s265 = scalar_select %p264, %s20, 1
        %p266 = scmp.lt.s32.totalorder %s263, 7
        %s267 = scalar_select %p266, %s263, 7
        %s268 = smul.addr %s265, 8
        %s269 = sadd.s32 %s267, %s268
        %s270 = smul.addr %s269, 4
        %s271 = scalar_lea.vmem %s0, %s270
        %s272 = sadd.s32 %s21, %s22
        %s273 = smul.u32 2, %s272
        %s274 = sadd.s32 %s21, 1
        %s275 = sadd.s32 %s274, %s22
        %s276 = smul.u32 2, %s275
        %p277 = scmp.lt.s32.totalorder %s20, 1
        %s278 = scalar_select %p277, %s20, 1
        %p279 = scmp.lt.s32.totalorder %s276, 7
        %s280 = scalar_select %p279, %s276, 7
        %s281 = smul.addr %s278, 8
        %s282 = sadd.s32 %s280, %s281
        %s283 = smul.addr %s282, 4
        %s284 = scalar_lea.vmem %s1, %s283
        %s285 = sadd.s32 %s21, 1
        %s286 = sadd.s32 %s285, %s22
        %s287 = smul.u32 2, %s286
        %s288 = sadd.s32 %s21, %s22
        %s289 = smul.u32 2, %s288
        %v290 = vld [vmem:[%s271] sm:$0x77]
        %v291 = vld [vmem:[%s284] sm:$0x77]
        %v292 = vld [vmem:[%s2] sm:$0x7f]
        %v293 = vld [vmem:[%s3] sm:$0xff]
        %v294 = vld [vmem:[%s3 + $0x8] sm:$0xff]
        %v295 = vld [vmem:[%s3 + $0x10] sm:$0xff]
        %v296 = vld [vmem:[%s3 + $0x18] sm:$0xff]
        %298 = vset.pattern.permute.xlu0 0
        %299 = vperm.xlu0 %298, %v292
        %v300 = vpop.permute.xlu0 %299
        %v303 = vcombine.high %v290, %v290
        %v305 = vmul.f32 %v300, %v290
        %v306 = vmul.f32 %v300, %v303
        %vm307 = vcmask 1042432
        %v308 = vsel %vm307, %v305, 0.0
        %v309 = vrot.slane %v308, 4
        %v310 = vadd.f32 %v308, %v309
        %v311 = vrot.slane %v310, 2
        %v312 = vadd.f32 %v310, %v311
        %v313 = vrot.slane %v312, 1
        %v314 = vadd.f32 %v312, %v313
        %v315 = vsel %vm307, %v306, 0.0
        %v316 = vrot.slane %v315, 4
        %v317 = vadd.f32 %v315, %v316
        %v318 = vrot.slane %v317, 2
        %v319 = vadd.f32 %v317, %v318
        %v320 = vrot.slane %v319, 1
        %v321 = vadd.f32 %v319, %v320
        %v323 = vcombine.high %v291, %v291
        %v324 = vrot.slane %v291, 5
        %v325 = vrot.slane %v323, 5
        %v328 = vmul.f32 %v300, %v324
        %v329 = vmul.f32 %v300, %v325
        %v332 = vrot.slane %v328, 3
        %v333 = vrot.slane %v329, 3
        %v336 = vsel %vm307, %v332, 0.0
        %v337 = vrot.slane %v336, 4
        %v338 = vadd.f32 %v336, %v337
        %v339 = vrot.slane %v338, 2
        %v340 = vadd.f32 %v338, %v339
        %v341 = vrot.slane %v340, 1
        %v342 = vadd.f32 %v340, %v341
        %v343 = vsel %vm307, %v333, 0.0
        %v344 = vrot.slane %v343, 4
        %v345 = vadd.f32 %v343, %v344
        %v346 = vrot.slane %v345, 2
        %v347 = vadd.f32 %v345, %v346
        %v348 = vrot.slane %v347, 1
        %v349 = vadd.f32 %v347, %v348
        %v350 = vadd.f32 %v314, %v342
        %v351 = vadd.f32 %v321, %v349
        %v352 = vadd.f32 %v350, %v300
        %v353 = vadd.f32 %v351, %v300
        %v354 = vmul.f32 %v352, 0.0625
        %v355 = vmul.f32 %v353, 0.0625
        %356 = vset.pattern.permute.xlu0 1
        %357 = vperm.xlu0 %356, %v292
        %v358 = vpop.permute.xlu0 %357
        %v360 = vmul.f32 %v358, %v290
        %v361 = vmul.f32 %v358, %v303
        %v362 = vsel %vm307, %v360, 0.0
        %v363 = vrot.slane %v362, 4
        %v364 = vadd.f32 %v362, %v363
        %v365 = vrot.slane %v364, 2
        %v366 = vadd.f32 %v364, %v365
        %v367 = vrot.slane %v366, 1
        %v368 = vadd.f32 %v366, %v367
        %v369 = vsel %vm307, %v361, 0.0
        %v370 = vrot.slane %v369, 4
        %v371 = vadd.f32 %v369, %v370
        %v372 = vrot.slane %v371, 2
        %v373 = vadd.f32 %v371, %v372
        %v374 = vrot.slane %v373, 1
        %v375 = vadd.f32 %v373, %v374
        %v376 = vmul.f32 %v358, %v324
        %v377 = vmul.f32 %v358, %v325
        %v380 = vrot.slane %v376, 3
        %v381 = vrot.slane %v377, 3
        %v384 = vsel %vm307, %v380, 0.0
        %v385 = vrot.slane %v384, 4
        %v386 = vadd.f32 %v384, %v385
        %v387 = vrot.slane %v386, 2
        %v388 = vadd.f32 %v386, %v387
        %v389 = vrot.slane %v388, 1
        %v390 = vadd.f32 %v388, %v389
        %v391 = vsel %vm307, %v381, 0.0
        %v392 = vrot.slane %v391, 4
        %v393 = vadd.f32 %v391, %v392
        %v394 = vrot.slane %v393, 2
        %v395 = vadd.f32 %v393, %v394
        %v396 = vrot.slane %v395, 1
        %v397 = vadd.f32 %v395, %v396
        %v398 = vadd.f32 %v368, %v390
        %v399 = vadd.f32 %v375, %v397
        %v400 = vadd.f32 %v398, %v358
        %v401 = vadd.f32 %v399, %v358
        %v402 = vmul.f32 %v400, 0.0625
        %v403 = vmul.f32 %v401, 0.0625
        %v404 = vmax.f32 %v354, -0.02
        %v405 = vmax.f32 %v355, -0.02
        %v406 = vmin.f32 %v404, 0.02
        %v407 = vmin.f32 %v405, 0.02
        %v408 = vadd.f32 %v406, 0.02
        %v409 = vadd.f32 %v407, 0.02
        %v410 = vmul.f32 %v408, 6375.0
        %v411 = vmul.f32 %v409, 6375.0
        %v412 = vfloor.f32 %v410
        %v413 = vfloor.f32 %v411
        %v414 = vmin.f32 %v412, 254.0
        %v415 = vmin.f32 %v413, 254.0
        %v416 = vmax.f32 %v402, -0.02
        %v417 = vmax.f32 %v403, -0.02
        %v418 = vmin.f32 %v416, 0.02
        %v419 = vmin.f32 %v417, 0.02
        %v420 = vadd.f32 %v418, 0.02
        %v421 = vadd.f32 %v419, 0.02
        %v422 = vmul.f32 %v420, 6375.0
        %v423 = vmul.f32 %v421, 6375.0
        %v424 = vfloor.f32 %v422
        %v425 = vfloor.f32 %v423
        %v426 = vmin.f32 %v424, 254.0
        %v427 = vmin.f32 %v425, 254.0
        %429 = vset.pattern.permute.xlu0 0
        %430 = vperm.xlu0 %429, %v293
        %v431 = vpop.permute.xlu0 %430
        %434 = vset.pattern.permute.xlu0 0
        %435 = vperm.xlu0 %434, %v294
        %v436 = vpop.permute.xlu0 %435
        %439 = vset.pattern.permute.xlu0 0
        %440 = vperm.xlu0 %439, %v295
        %v441 = vpop.permute.xlu0 %440
        %444 = vset.pattern.permute.xlu0 0
        %445 = vperm.xlu0 %444, %v296
        %v446 = vpop.permute.xlu0 %445
        %v448 = vlaneseq
        %v449 = vshrl.u32 %v448, 7
        %v450 = vsub.s32 6, %v449
        %v451 = vrot.slane %v414, %v450
        %v452 = vlaneseq
        %v453 = vshrl.u32 %v452, 7
        %v454 = vsub.s32 6, %v453
        %v455 = vrot.slane %v415, %v454
        %v456 = vmul.f32 %v431, %v451
        %v457 = vmul.f32 %v431, %v455
        %v458 = vmul.f32 %v436, %v451
        %v459 = vmul.f32 %v436, %v455
        %v460 = vmul.f32 %v441, %v451
        %v461 = vmul.f32 %v441, %v455
        %v462 = vmul.f32 %v446, %v451
        %v463 = vmul.f32 %v446, %v455
        %464 = vset.pattern.permute.xlu0 1
        %465 = vperm.xlu0 %464, %v293
        %v466 = vpop.permute.xlu0 %465
        %468 = vset.pattern.permute.xlu0 1
        %469 = vperm.xlu0 %468, %v294
        %v470 = vpop.permute.xlu0 %469
        %472 = vset.pattern.permute.xlu0 1
        %473 = vperm.xlu0 %472, %v295
        %v474 = vpop.permute.xlu0 %473
        %476 = vset.pattern.permute.xlu0 1
        %477 = vperm.xlu0 %476, %v296
        %v478 = vpop.permute.xlu0 %477
        %v480 = vlaneseq
        %v481 = vshrl.u32 %v480, 7
        %v482 = vsub.s32 6, %v481
        %v483 = vrot.slane %v426, %v482
        %v484 = vlaneseq
        %v485 = vshrl.u32 %v484, 7
        %v486 = vsub.s32 6, %v485
        %v487 = vrot.slane %v427, %v486
        %v488 = vmul.f32 %v466, %v483
        %v489 = vmul.f32 %v466, %v487
        %v490 = vmul.f32 %v470, %v483
        %v491 = vmul.f32 %v470, %v487
        %v492 = vmul.f32 %v474, %v483
        %v493 = vmul.f32 %v474, %v487
        %v494 = vmul.f32 %v478, %v483
        %v495 = vmul.f32 %v478, %v487
        %v496 = vadd.f32 %v456, %v488
        %v497 = vadd.f32 %v457, %v489
        %v498 = vadd.f32 %v458, %v490
        %v499 = vadd.f32 %v459, %v491
        %v500 = vadd.f32 %v460, %v492
        %v501 = vadd.f32 %v461, %v493
        %v502 = vadd.f32 %v462, %v494
        %v503 = vadd.f32 %v463, %v495
        %504 = vset.pattern.permute.xlu0 2
        %505 = vperm.xlu0 %504, %v293
        %v506 = vpop.permute.xlu0 %505
        %508 = vset.pattern.permute.xlu0 2
        %509 = vperm.xlu0 %508, %v294
        %v510 = vpop.permute.xlu0 %509
        %512 = vset.pattern.permute.xlu0 2
        %513 = vperm.xlu0 %512, %v295
        %v514 = vpop.permute.xlu0 %513
        %516 = vset.pattern.permute.xlu0 2
        %517 = vperm.xlu0 %516, %v296
        %v518 = vpop.permute.xlu0 %517
        %v520 = vadd.f32 %v496, %v506
        %v521 = vadd.f32 %v497, %v506
        %v522 = vadd.f32 %v498, %v510
        %v523 = vadd.f32 %v499, %v510
        %v524 = vadd.f32 %v500, %v514
        %v525 = vadd.f32 %v501, %v514
        %v526 = vadd.f32 %v502, %v518
        %v527 = vadd.f32 %v503, %v518
        %v528 = vmax.f32 %v520, 0.0
        %v529 = vmax.f32 %v521, 0.0
        %v530 = vmax.f32 %v522, 0.0
        %v531 = vmax.f32 %v523, 0.0
        %v532 = vmax.f32 %v524, 0.0
        %v533 = vmax.f32 %v525, 0.0
        %v534 = vmax.f32 %v526, 0.0
        %v535 = vmax.f32 %v527, 0.0
        %536 = vst [vmem:[%s261] sm:$0xff] %v528
        %537 = vst [vmem:[%s261 + $0x8] sm:$0xff] %v529
        %538 = vst [vmem:[%s261 + $0x10] sm:$0xff] %v530
        %539 = vst [vmem:[%s261 + $0x18] sm:$0xff] %v531
        %540 = vst [vmem:[%s261 + $0x20] sm:$0xff] %v532
        %541 = vst [vmem:[%s261 + $0x28] sm:$0xff] %v533
        %542 = vst [vmem:[%s261 + $0x30] sm:$0xff] %v534
        %543 = vst [vmem:[%s261 + $0x38] sm:$0xff] %v535
        %s544 = sand.u32 %s150, 1
        %s545 = sand.u32 %s150, 1
        %s546 = smul.addr %s545, 64
        %s547 = scalar_lea.vmem [#allocation2], %s546
        // Predicated region
        $region37: #{flow_wrapper_forward.1} parent=35 // pred_check
          %p548 = pneg %p160
        $region38: #{flow_wrapper_forward.1} parent=35 // pred_check_branch
          %550 = sbr.rel (%p548) target = $region40
        $region39: #{flow_wrapper_forward.1} parent=35 // pred_region
          %s551 = sadd.s32 %s21, %s22
          %s552 = smul.u32 2, %s551
          %s553 = smul.addr %s20, 24
          %s554 = sadd.s32 %s552, %s553
          %s555 = smul.addr %s554, 8
          %s556 = scalar_lea.vmem %s4, %s555
          // Predicated region
          $region41: #{flow_wrapper_forward.1} parent=39 // pred_check
            _
          $region42: #{flow_wrapper_forward.1} parent=39 // pred_check_branch
            %558 = sbr.rel (0) target = $region44
          $region43: #{flow_wrapper_forward.1} parent=39 // pred_region
            // Predicated region
            $region45: #{flow_wrapper_forward.1} parent=43 // pred_check
              _
            $region46: #{flow_wrapper_forward.1} parent=43 // pred_check_branch
              %560 = sbr.rel (0) target = $region48
            $region47: #{flow_wrapper_forward.1} parent=43 // pred_region
              loop: start=0, step=1, limit=1
              $region49: #{flow_wrapper_forward.1} parent=47 // loop_pre_header
                _
              $region50: #{flow_wrapper_forward.1} parent=47 // loop_header
                %s562 = sphi 0, %s566
                %p563 = scmp.ge.s32.totalorder %s562, 1
                %s567 = sphi %s547, %s547
                %s568 = sphi %s556, %s556
              $region51: #{flow_wrapper_forward.1} parent=47 // loop_header_branch
                %565 = sbr.rel (%p563) target = $region55
              $region52: #{flow_wrapper_forward.1} parent=47 // loop_body
                %v569 = vld [vmem:[%s567] sm:$0xff]
                %570 = vst [vmem:[%s568] sm:$0xff] %v569
                %v571 = vld [vmem:[%s567 + $0x8] sm:$0xff]
                %572 = vst [vmem:[%s568 + $0x8] sm:$0xff] %v571
                %v573 = vld [vmem:[%s567 + $0x10] sm:$0xff]
                %574 = vst [vmem:[%s568 + $0x30] sm:$0xff] %v573
                %v575 = vld [vmem:[%s567 + $0x18] sm:$0xff]
                %576 = vst [vmem:[%s568 + $0x38] sm:$0xff] %v575
                %v577 = vld [vmem:[%s567 + $0x20] sm:$0xff]
                %578 = vst [vmem:[%s568 + $0x60] sm:$0xff] %v577
                %v579 = vld [vmem:[%s567 + $0x28] sm:$0xff]
                %580 = vst [vmem:[%s568 + $0x68] sm:$0xff] %v579
                %v581 = vld [vmem:[%s567 + $0x30] sm:$0xff]
                %582 = vst [vmem:[%s568 + $0x90] sm:$0xff] %v581
                %v583 = vld [vmem:[%s567 + $0x38] sm:$0xff]
                %584 = vst [vmem:[%s568 + $0x98] sm:$0xff] %v583
              $region53: #{flow_wrapper_forward.1} parent=47 // loop_footer
                %s566 = sadd.s32 1, %s562
              $region54: #{flow_wrapper_forward.1} parent=47 // loop_footer_branch
                %561 = sbr.rel target = $region50
              $region55: #{flow_wrapper_forward.1} parent=47 // loop_exit
                _
            $region48: #{flow_wrapper_forward.1} parent=43 // pred_fallthru
              _
            // Predicated region
            $region56: #{flow_wrapper_forward.1} parent=43 // pred_check
              _
            $region57: #{flow_wrapper_forward.1} parent=43 // pred_check_branch
              %586 = sbr.rel target = $region59
            $region58: #{flow_wrapper_forward.1} parent=43 // pred_region
              _
            $region59: #{flow_wrapper_forward.1} parent=43 // pred_fallthru
              _
          $region44: #{flow_wrapper_forward.1} parent=39 // pred_fallthru
            _
          %587 = vnop
        $region40: #{flow_wrapper_forward.1} parent=35 // pred_fallthru
          _
      $region36: #{flow_wrapper_forward.1} parent=5 // pred_fallthru
        _
      %p588 = scmp.le.s32.totalorder 2, %s10
      // Predicated region
      $region60: #{flow_wrapper_forward.1} parent=5 // pred_check
        %p589 = pneg %p588
      $region61: #{flow_wrapper_forward.1} parent=5 // pred_check_branch
        %591 = sbr.rel (%p589) target = $region63
      $region62: #{flow_wrapper_forward.1} parent=5 // pred_region
        %s592 = ssub.s32 %s10, 2
        // Predicated region
        $region64: #{flow_wrapper_forward.1} parent=62 // pred_check
          %p593 = pneg %p166
        $region65: #{flow_wrapper_forward.1} parent=62 // pred_check_branch
          %595 = sbr.rel (%p593) target = $region67
        $region66: #{flow_wrapper_forward.1} parent=62 // pred_region
          %s596 = sand.u32 %s151, 1
          %s597 = sand.u32 %s151, 1
          %s598 = smul.addr %s597, 64
          %s599 = scalar_lea.vmem [#allocation2], %s598
        $region67: #{flow_wrapper_forward.1} parent=62 // pred_fallthru
          _
      $region63: #{flow_wrapper_forward.1} parent=5 // pred_fallthru
        _
    $region6: #{flow_wrapper_forward.1} parent=1 // loop_footer
      %s14 = sadd.s32 1, %s10
    $region7: #{flow_wrapper_forward.1} parent=1 // loop_footer_branch
      %9 = sbr.rel target = $region3
    $region8: #{flow_wrapper_forward.1} parent=1 // loop_exit
      _

</llo_original>
